<compile_context>
chip_gen: v7x
topology: tpu7x:2x2x1
jax: 0.10.0
libtpu: 0.0.40
codegen_flags: <defaults>
</compile_context>

<pallas_src>
import functools

import jax
import jax.numpy as jnp
from jax.experimental import pallas as pl
from jax.experimental.pallas import tpu as pltpu


def _round_up(x, m):
    return (x + m - 1) // m * m


# ----------------------------- Pallas kernels --------------------------------

def _conv_kernel(*refs, act, with_stats):
    """act(A @ W + bias) for one (row-tile, channel-tile); optionally also
    accumulates per-channel sum / sum-of-squares across the row-tile axis."""
    a_ref, w_ref, b_ref = refs[0], refs[1], refs[2]
    idx = 3
    slope_ref = None
    if act == "prelu":
        slope_ref = refs[idx]
        idx += 1
    y_ref = refs[idx]
    idx += 1
    stats_ref = refs[idx] if with_stats else None

    y = jnp.dot(a_ref[...], w_ref[...], preferred_element_type=jnp.float32)
    y = y + b_ref[...]
    if act == "prelu":
        y = jnp.where(y > 0, y, slope_ref[...] * y)
    elif act == "tanh":
        y = jnp.tanh(y)
    y_ref[...] = y

    if with_stats:
        @pl.when(pl.program_id(1) == 0)       # first row tile of this channel tile
        def _init():
            stats_ref[...] = jnp.zeros_like(stats_ref)

        s = jnp.sum(y, axis=0, keepdims=True)
        ss = jnp.sum(y * y, axis=0, keepdims=True)
        ridx = jax.lax.broadcasted_iota(jnp.int32, stats_ref.shape, 0)
        stats_ref[...] += jnp.where(ridx == 0, s, 0.0) + jnp.where(ridx == 1, ss, 0.0)


def _affine_act_kernel(*refs, act, has_res):
    """Elementwise y*scale + shift, optional PReLU, optional residual add."""
    y_ref, sc_ref, sh_ref = refs[0], refs[1], refs[2]
    idx = 3
    res_ref = None
    slope_ref = None
    if has_res:
        res_ref = refs[idx]
        idx += 1
    if act == "prelu":
        slope_ref = refs[idx]
        idx += 1
    o_ref = refs[idx]

    y = y_ref[...] * sc_ref[...] + sh_ref[...]
    if act == "prelu":
        y = jnp.where(y > 0, y, slope_ref[...] * y)
    if has_res:
        y = y + res_ref[...]
    o_ref[...] = y


# ----------------------------- pallas_call builders ---------------------------

def _conv_pallas(ap, wp, bp, slope_row, *, tm, tn, act, with_stats):
    mp, kp = ap.shape
    cp = wp.shape[1]
    nt, mt = cp // tn, mp // tm

    in_specs = [
        pl.BlockSpec((tm, kp), lambda j, i: (i, 0)),   # im2col row tile
        pl.BlockSpec((kp, tn), lambda j, i: (0, j)),   # weight column tile
        pl.BlockSpec((1, tn), lambda j, i: (0, j)),    # bias row
    ]
    inputs = [ap, wp, bp]
    if act == "prelu":
        in_specs.append(pl.BlockSpec((1, tn), lambda j, i: (0, j)))
        inputs.append(slope_row)

    out_shape = [jax.ShapeDtypeStruct((mp, cp), jnp.float32)]
    out_specs = [pl.BlockSpec((tm, tn), lambda j, i: (i, j))]
    if with_stats:
        out_shape.append(jax.ShapeDtypeStruct((8, cp), jnp.float32))
        # stats block is constant across the (last) row axis -> resident accumulator
        out_specs.append(pl.BlockSpec((8, tn), lambda j, i: (0, j)))

    outs = pl.pallas_call(
        functools.partial(_conv_kernel, act=act, with_stats=with_stats),
        out_shape=tuple(out_shape),
        grid_spec=pltpu.PrefetchScalarGridSpec(
            num_scalar_prefetch=0,
            grid=(nt, mt),                              # row (reduction-for-stats) axis last
            in_specs=in_specs,
            out_specs=tuple(out_specs),
        ),
        compiler_params=pltpu.CompilerParams(
            dimension_semantics=("parallel", "arbitrary" if with_stats else "parallel"),
            vmem_limit_bytes=48 * 1024 * 1024,
        ),
    )(*inputs)
    return (outs[0], outs[1]) if with_stats else (outs[0], None)


def _affine_pallas(yp, scale, shift, res, slope_row, *, act):
    mp, cp = yp.shape
    tm = 512 if mp % 512 == 0 else mp
    tn = 256 if cp % 256 == 0 else 128

    in_specs = [
        pl.BlockSpec((tm, tn), lambda i, j: (i, j)),
        pl.BlockSpec((1, tn), lambda i, j: (0, j)),
        pl.BlockSpec((1, tn), lambda i, j: (0, j)),
    ]
    inputs = [yp, scale, shift]
    has_res = res is not None
    if has_res:
        in_specs.append(pl.BlockSpec((tm, tn), lambda i, j: (i, j)))
        inputs.append(res)
    if act == "prelu":
        in_specs.append(pl.BlockSpec((1, tn), lambda i, j: (0, j)))
        inputs.append(slope_row)

    return pl.pallas_call(
        functools.partial(_affine_act_kernel, act=act, has_res=has_res),
        out_shape=jax.ShapeDtypeStruct((mp, cp), jnp.float32),
        grid_spec=pltpu.PrefetchScalarGridSpec(
            num_scalar_prefetch=0,
            grid=(mp // tm, cp // tn),
            in_specs=in_specs,
            out_specs=pl.BlockSpec((tm, tn), lambda i, j: (i, j)),
        ),
        compiler_params=pltpu.CompilerParams(
            dimension_semantics=("parallel", "parallel")),
    )(*inputs)


# ----------------------------- JAX wrappers -----------------------------------

def _im2col(x, ksize, pad):
    """x: [N,H,W,C] -> patches [N*Hout*Wout, K*K*C] for a KxK / stride-1 conv."""
    n, h, w, c = x.shape
    hout = h + 2 * pad - ksize + 1
    wout = w + 2 * pad - ksize + 1
    xp = jnp.pad(x, ((0, 0), (pad, pad), (pad, pad), (0, 0)))
    cols = []
    for ky in range(ksize):
        for kx in range(ksize):
            cols.append(xp[:, ky:ky + hout, kx:kx + wout, :])
    patches = jnp.concatenate(cols, axis=-1)          # ordering (ky, kx, cin)
    return patches.reshape(n * hout * wout, ksize * ksize * c)


# TODO(synk): fuse the patch extraction into the conv kernel (K*K shifted
# matmuls over NHWC tiles) to avoid materializing the im2col tensor in HBM;
# for now the blow-up is mitigated by emitting the patches in bf16.
@functools.partial(jax.jit, static_argnames=("ksize", "pad", "act", "with_stats"))
def conv2d_apply(x, w_hwio, bias, slope, *, ksize, pad, act, with_stats):
    """KxK stride-1 'same' conv as a tiled bf16 im2col matmul on the MXU.

    Returns (y_pad [mp, cp] f32, stats [8, cp] f32 or None).  stats rows 0/1
    hold per-channel sum / sum-of-squares over all mp rows; the padded rows
    contribute exactly `bias` each and are corrected by the caller.
    """
    n, h, w, cin = x.shape
    cout = w_hwio.shape[-1]
    a = _im2col(x.astype(jnp.bfloat16), ksize, pad)
    m, k = a.shape

    tm = min(512, _round_up(m, 8))
    mp = _round_up(m, tm)
    kp = _round_up(k, 128)
    cp = _round_up(cout, 128)
    tn = 256 if cp % 256 == 0 else 128

    ap = jnp.pad(a, ((0, mp - m), (0, kp - k)))
    wp = jnp.pad(w_hwio.reshape(ksize * ksize * cin, cout).astype(jnp.bfloat16),
                 ((0, kp - k), (0, cp - cout)))
    bp = jnp.pad(bias.astype(jnp.float32), (0, cp - cout)).reshape(1, cp)
    slope_row = None
    if act == "prelu":
        slope_row = jnp.broadcast_to(slope.astype(jnp.float32).reshape(1, 1), (1, cp))
    return _conv_pallas(ap, wp, bp, slope_row, tm=tm, tn=tn, act=act, with_stats=with_stats)


@functools.partial(jax.jit, static_argnames=("eps", "act", "valid_rows"))
def bn_act_apply(y_pad, stats, bias, gamma, beta, slope, residual, *, eps, act, valid_rows):
    """Training-mode BatchNorm2d (batch stats, biased variance) + optional
    PReLU + optional residual add, applied to the padded conv output."""
    mp, cp = y_pad.shape
    cout = gamma.shape[0]
    pad_rows = mp - valid_rows
    # padded im2col rows produce y == bias; remove their contribution.
    s = stats[0, :cout] - pad_rows * bias
    ss = stats[1, :cout] - pad_rows * bias * bias
    mean = s / valid_rows
    var = jnp.maximum(ss / valid_rows - mean * mean, 0.0)
    scale = gamma * jax.lax.rsqrt(var + eps)
    shift = beta - mean * scale
    scale_p = jnp.pad(scale, (0, cp - cout)).reshape(1, cp)
    shift_p = jnp.pad(shift, (0, cp - cout)).reshape(1, cp)

    res_p = None
    if residual is not None:
        rm, rc = residual.shape
        res_p = jnp.pad(residual, ((0, mp - rm), (0, cp - rc)))
    slope_row = None
    if act == "prelu":
        slope_row = jnp.broadcast_to(slope.astype(jnp.float32).reshape(1, 1), (1, cp))
    return _affine_pallas(y_pad, scale_p, shift_p, res_p, slope_row, act=act)


def pixel_shuffle_nhwc(x, r):
    """NHWC pixel shuffle matching torch.nn.PixelShuffle channel ordering."""
    n, h, w, c = x.shape
    cout = c // (r * r)
    x = x.reshape(n, h, w, cout, r, r)
    x = jnp.transpose(x, (0, 1, 4, 2, 5, 3))
    return x.reshape(n, h * r, w * r, cout)


# ----------------------------- model ------------------------------------------

def residual_block(x, blk):
    n, h, w, c = x.shape
    m = n * h * w
    y, stats = conv2d_apply(x, blk["w1"], blk["b1"], None,
                            ksize=3, pad=1, act=None, with_stats=True)
    t = bn_act_apply(y, stats, blk["b1"], blk["gamma1"], blk["beta1"], blk["slope"], None,
                     eps=0.8, act="prelu", valid_rows=m)
    t = t[:m, :c].reshape(n, h, w, c)
    y2, stats2 = conv2d_apply(t, blk["w2"], blk["b2"], None,
                              ksize=3, pad=1, act=None, with_stats=True)
    out = bn_act_apply(y2, stats2, blk["b2"], blk["gamma2"], blk["beta2"], None,
                       x.reshape(m, c), eps=0.8, act=None, valid_rows=m)
    return out[:m, :c].reshape(n, h, w, c)


def generator_forward(img_nchw, params):
    # external layout NCHW (PyTorch), internal compute NHWC.
    x = jnp.transpose(img_nchw, (0, 2, 3, 1)).astype(jnp.float32)
    n, h, w, _ = x.shape
    m = n * h * w

    # conv1: 9x9 conv + PReLU (fused in conv epilogue).
    p = params["conv1"]
    y, _ = conv2d_apply(x, p["w"], p["b"], p["slope"],
                        ksize=9, pad=4, act="prelu", with_stats=False)
    out1 = y[:m, :64].reshape(n, h, w, 64)

    xr = out1
    for blk in params["res_blocks"]:
        xr = residual_block(xr, blk)

    # conv2: 3x3 conv + BN(eps=0.8), then skip-connection with out1 (fused).
    p = params["conv2"]
    y, stats = conv2d_apply(xr, p["w"], p["b"], None,
                            ksize=3, pad=1, act=None, with_stats=True)
    out2 = bn_act_apply(y, stats, p["b"], p["gamma"], p["beta"], None,
                        out1.reshape(m, 64), eps=0.8, act=None, valid_rows=m)
    xu = out2[:m, :64].reshape(n, h, w, 64)

    # upsampling x2: conv -> BN -> PReLU (commutes with shuffle) -> PixelShuffle(2)
    for p in params["upsampling"]:
        nn_, hh, ww, _ = xu.shape
        mm = nn_ * hh * ww
        y, stats = conv2d_apply(xu, p["w"], p["b"], None,
                                ksize=3, pad=1, act=None, with_stats=True)
        t = bn_act_apply(y, stats, p["b"], p["gamma"], p["beta"], p["slope"], None,
                         eps=1e-5, act="prelu", valid_rows=mm)
        t = t[:mm, :256].reshape(nn_, hh, ww, 256)
        xu = pixel_shuffle_nhwc(t, 2)

    # conv3: 9x9 conv + tanh (fused).
    p = params["conv3"]
    nn_, hh, ww, _ = xu.shape
    mm = nn_ * hh * ww
    cout = p["w"].shape[-1]
    y, _ = conv2d_apply(xu, p["w"], p["b"], None,
                        ksize=9, pad=4, act="tanh", with_stats=False)
    out = y[:mm, :cout].reshape(nn_, hh, ww, cout)
    return jnp.transpose(out, (0, 3, 1, 2))   # back to NCHW


def init_params(key, in_channels=3, out_channels=3, n_residual_blocks=16):
    # Weights stored HWIO; to load PyTorch weights transpose (O,I,kh,kw) -> (kh,kw,I,O).
    def conv_w(k, ksz, cin, cout):
        kw, kb = jax.random.split(k)
        w = 0.05 * jax.random.normal(kw, (ksz, ksz, cin, cout), jnp.float32)
        b = 0.05 * jax.random.normal(kb, (cout,), jnp.float32)
        return w, b

    keys = jax.random.split(key, n_residual_blocks + 8)
    ones64, zeros64 = jnp.ones((64,), jnp.float32), jnp.zeros((64,), jnp.float32)
    prelu0 = jnp.full((1, 1), 0.25, jnp.float32)        # PyTorch PReLU default init

    params = {}
    w, b = conv_w(keys[0], 9, in_channels, 64)
    params["conv1"] = dict(w=w, b=b, slope=prelu0)

    blocks = []
    for i in range(n_residual_blocks):
        k1, k2 = jax.random.split(keys[1 + i])
        w1, b1 = conv_w(k1, 3, 64, 64)
        w2, b2 = conv_w(k2, 3, 64, 64)
        blocks.append(dict(w1=w1, b1=b1, gamma1=ones64, beta1=zeros64, slope=prelu0,
                           w2=w2, b2=b2, gamma2=ones64, beta2=zeros64))
    params["res_blocks"] = blocks

    w, b = conv_w(keys[1 + n_residual_blocks], 3, 64, 64)
    params["conv2"] = dict(w=w, b=b, gamma=ones64, beta=zeros64)

    ups = []
    for i in range(2):
        w, b = conv_w(keys[2 + n_residual_blocks + i], 3, 64, 256)
        ups.append(dict(w=w, b=b, gamma=jnp.ones((256,), jnp.float32),
                        beta=jnp.zeros((256,), jnp.float32), slope=prelu0))
    params["upsampling"] = ups

    w, b = conv_w(keys[4 + n_residual_blocks], 9, 64, out_channels)
    params["conv3"] = dict(w=w, b=b)
    return params


if __name__ == "__main__":
    in_channels, out_channels, height, width = 3, 3, 16, 16
    img = jax.random.normal(jax.random.PRNGKey(0),
                            (2, in_channels, height, width), jnp.float32)
    params = init_params(jax.random.PRNGKey(1), in_channels, out_channels,
                         n_residual_blocks=16)

    out = generator_forward(img, params)
    out = jax.block_until_ready(out)

    # Super-resolution output: [N, out_channels, 4H, 4W], tanh-bounded.
    assert out.shape == (2, out_channels, 4 * height, 4 * width), out.shape
    assert bool(jnp.all(jnp.isfinite(out)))
    print("KERNEL_OK")
</pallas_src>

<mosaic_0001>
module attributes {stable_mosaic.version = 11 : i64} {
  func.func @_conv_kernel(%arg0: i32, %arg1: i32, %arg2: memref<512x256xbf16, #tpu.memory_space<vmem>>, %arg3: memref<256x128xbf16, #tpu.memory_space<vmem>>, %arg4: memref<1x128xf32, #tpu.memory_space<vmem>>, %arg5: memref<1x128xf32, #tpu.memory_space<vmem>>, %arg6: memref<512x128xf32, #tpu.memory_space<vmem>>) attributes {dimension_semantics = [#tpu.dimension_semantics<parallel>, #tpu.dimension_semantics<parallel>], iteration_bounds = array<i64: 1, 1>, scalar_prefetch = 0 : i64, scratch_operands = 0 : i64, tpu.core_type = #tpu.core_type<tc>, window_params = [{transform_indices = @transform_0, window_bounds = array<i64: 512, 256>}, {transform_indices = @transform_1, window_bounds = array<i64: 256, 128>}, {transform_indices = @transform_2, window_bounds = array<i64: 1, 128>}, {transform_indices = @transform_3, window_bounds = array<i64: 1, 128>}, {transform_indices = @transform_4, window_bounds = array<i64: 512, 128>}]} {
    %c0 = arith.constant 0 : index
    %c0_0 = arith.constant 0 : index
    %0 = vector.load %arg2[%c0, %c0_0] : memref<512x256xbf16, #tpu.memory_space<vmem>>, vector<512x256xbf16>
    %c0_1 = arith.constant 0 : index
    %c0_2 = arith.constant 0 : index
    %1 = vector.load %arg3[%c0_1, %c0_2] : memref<256x128xbf16, #tpu.memory_space<vmem>>, vector<256x128xbf16>
    %cst = arith.constant dense<0.000000e+00> : vector<512x128xf32>
    %2 = tpu.matmul %0, %1, %cst {dimension_numbers = #tpu.dot_dimension_numbers<[1], [0], [0], [1], [0, 0, 1, 1], [], []>} : vector<512x256xbf16>, vector<256x128xbf16>, vector<512x128xf32> -> vector<512x128xf32>
    %c0_3 = arith.constant 0 : index
    %c0_4 = arith.constant 0 : index
    %3 = vector.load %arg4[%c0_3, %c0_4] : memref<1x128xf32, #tpu.memory_space<vmem>>, vector<1x128xf32>
    %4 = vector.broadcast %3 : vector<1x128xf32> to vector<512x128xf32>
    %5 = arith.addf %2, %4 : vector<512x128xf32>
    %cst_5 = arith.constant 0.000000e+00 : f32
    %6 = vector.broadcast %cst_5 : f32 to vector<512x128xf32>
    %7 = arith.cmpf ogt, %5, %6 : vector<512x128xf32>
    %c0_6 = arith.constant 0 : index
    %c0_7 = arith.constant 0 : index
    %8 = vector.load %arg5[%c0_6, %c0_7] : memref<1x128xf32, #tpu.memory_space<vmem>>, vector<1x128xf32>
    %9 = vector.broadcast %8 : vector<1x128xf32> to vector<512x128xf32>
    %10 = arith.mulf %9, %5 : vector<512x128xf32>
    %11 = arith.select %7, %5, %10 : vector<512x128xi1>, vector<512x128xf32>
    %c0_8 = arith.constant 0 : index
    %c0_9 = arith.constant 0 : index
    %12 = vector.load %arg6[%c0_8, %c0_9] : memref<512x128xf32, #tpu.memory_space<vmem>>, vector<512x128xf32>
    tpu.vector_store %arg6[%c0_8, %c0_9], %11 {strides = array<i32>} : memref<512x128xf32, #tpu.memory_space<vmem>>, vector<512x128xf32>,
    return
  }
  func.func @transform_0(%arg0: i32, %arg1: i32) -> (i32, i32) {
    %c0_i32 = arith.constant 0 : i32
    %c0_i32_0 = arith.constant 0 : i32
    return %arg1, %c0_i32 : i32, i32
  }
  func.func @transform_1(%arg0: i32, %arg1: i32) -> (i32, i32) {
    %c0_i32 = arith.constant 0 : i32
    %c0_i32_0 = arith.constant 0 : i32
    return %c0_i32, %arg0 : i32, i32
  }
  func.func @transform_2(%arg0: i32, %arg1: i32) -> (i32, i32) {
    %c0_i32 = arith.constant 0 : i32
    %c0_i32_0 = arith.constant 0 : i32
    return %c0_i32, %arg0 : i32, i32
  }
  func.func @transform_3(%arg0: i32, %arg1: i32) -> (i32, i32) {
    %c0_i32 = arith.constant 0 : i32
    %c0_i32_0 = arith.constant 0 : i32
    return %c0_i32, %arg0 : i32, i32
  }
  func.func @transform_4(%arg0: i32, %arg1: i32) -> (i32, i32) {
    %c0_i32 = arith.constant 0 : i32
    return %arg1, %arg0 : i32, i32
  }
}

</mosaic_0001>

<llo_original>
// kernel: conv2d_apply.1
$region0: #{conv2d_apply.1}
  #allocation0 [shape = 'u32[]', space=smem, size = 0x4, offset = 0x4, fixed_abs, tag = 'smem constant byte address 0x4 - core index']
  #allocation1 [shape = 'u32[144,128]{1,0:T(1,128)}', space=vmem, size = 0x12000, scoped, tag = 'internal scratch']
  %s0 = inlined_call_operand.vmem [shape: bf16[512,256], index: 0, kind: input, shape index: {}]
  %s1 = inlined_call_operand.vmem [shape: bf16[256,128], index: 1, kind: input, shape index: {}]
  %s2 = inlined_call_operand.vmem [shape: f32[1,128], index: 2, kind: input, shape index: {}]
  %s3 = inlined_call_operand.vmem [shape: f32[1,128], index: 3, kind: input, shape index: {}]
  %s4 = inlined_call_operand.hbm [shape: f32[512,128], index: 4, kind: output, shape index: {}]
  %s5 = sld [smem:[#allocation0]]
  $region26: #{conv2d_apply.1} parent=0
    _
  %s7 = ssub.s32 1, %s5
  %s8 = scalar_select 0, %s7, %s5
  $region1: #{conv2d_apply.1} parent=0
    #allocation2 [shape = 'u8[262144]{0}', space=vmem, size = 0x40000, scoped, tag = 'output window, operand 0, single buffered']
    #allocation3 [shape = 's32[1]{0}', space=sflag, size = 0x4, scoped, tag = 'scoped memory for conv2d_apply.1']
    %9 = vsyncpa [#allocation3], 0
    // Predicated region
    $region2: #{conv2d_apply.1} parent=1 // pred_check
      _
    $region3: #{conv2d_apply.1} parent=1 // pred_check_branch
      %11 = sbr.rel (0) target = $region5
    $region4: #{conv2d_apply.1} parent=1 // pred_region
      _
    $region5: #{conv2d_apply.1} parent=1 // pred_fallthru
      _
    // Predicated region
    $region6: #{conv2d_apply.1} parent=1 // pred_check
      _
    $region7: #{conv2d_apply.1} parent=1 // pred_check_branch
      %13 = sbr.rel (0) target = $region9
    $region8: #{conv2d_apply.1} parent=1 // pred_region
      _
    $region9: #{conv2d_apply.1} parent=1 // pred_fallthru
      _
    // Predicated region
    $region10: #{conv2d_apply.1} parent=1 // pred_check
      _
    $region11: #{conv2d_apply.1} parent=1 // pred_check_branch
      %15 = sbr.rel (0) target = $region13
    $region12: #{conv2d_apply.1} parent=1 // pred_region
      _
    $region13: #{conv2d_apply.1} parent=1 // pred_fallthru
      _
    // Predicated region
    $region14: #{conv2d_apply.1} parent=1 // pred_check
      _
    $region15: #{conv2d_apply.1} parent=1 // pred_check_branch
      %17 = sbr.rel (0) target = $region17
    $region16: #{conv2d_apply.1} parent=1 // pred_region
      _
    $region17: #{conv2d_apply.1} parent=1 // pred_fallthru
      _
    %v19 = vld [vmem:[%s0] sm:$0xff]
    %v20 = vld [vmem:[%s0 + $0x8] sm:$0xff]
    %v21 = vld [vmem:[%s0 + $0x10] sm:$0xff]
    %v22 = vld [vmem:[%s0 + $0x18] sm:$0xff]
    %v23 = vld [vmem:[%s0 + $0x20] sm:$0xff]
    %v24 = vld [vmem:[%s0 + $0x28] sm:$0xff]
    %v25 = vld [vmem:[%s0 + $0x30] sm:$0xff]
    %v26 = vld [vmem:[%s0 + $0x38] sm:$0xff]
    %v27 = vld [vmem:[%s0 + $0x40] sm:$0xff]
    %v28 = vld [vmem:[%s0 + $0x48] sm:$0xff]
    %v29 = vld [vmem:[%s0 + $0x50] sm:$0xff]
    %v30 = vld [vmem:[%s0 + $0x58] sm:$0xff]
    %v31 = vld [vmem:[%s0 + $0x60] sm:$0xff]
    %v32 = vld [vmem:[%s0 + $0x68] sm:$0xff]
    %v33 = vld [vmem:[%s0 + $0x70] sm:$0xff]
    %v34 = vld [vmem:[%s0 + $0x78] sm:$0xff]
    %v35 = vld [vmem:[%s0 + $0x80] sm:$0xff]
    %v36 = vld [vmem:[%s0 + $0x88] sm:$0xff]
    %v37 = vld [vmem:[%s0 + $0x90] sm:$0xff]
    %v38 = vld [vmem:[%s0 + $0x98] sm:$0xff]
    %v39 = vld [vmem:[%s0 + $0xa0] sm:$0xff]
    %v40 = vld [vmem:[%s0 + $0xa8] sm:$0xff]
    %v41 = vld [vmem:[%s0 + $0xb0] sm:$0xff]
    %v42 = vld [vmem:[%s0 + $0xb8] sm:$0xff]
    %v43 = vld [vmem:[%s0 + $0xc0] sm:$0xff]
    %v44 = vld [vmem:[%s0 + $0xc8] sm:$0xff]
    %v45 = vld [vmem:[%s0 + $0xd0] sm:$0xff]
    %v46 = vld [vmem:[%s0 + $0xd8] sm:$0xff]
    %v47 = vld [vmem:[%s0 + $0xe0] sm:$0xff]
    %v48 = vld [vmem:[%s0 + $0xe8] sm:$0xff]
    %v49 = vld [vmem:[%s0 + $0xf0] sm:$0xff]
    %v50 = vld [vmem:[%s0 + $0xf8] sm:$0xff]
    %v51 = vld [vmem:[%s0 + $0x100] sm:$0xff]
    %v52 = vld [vmem:[%s0 + $0x108] sm:$0xff]
    %v53 = vld [vmem:[%s0 + $0x110] sm:$0xff]
    %v54 = vld [vmem:[%s0 + $0x118] sm:$0xff]
    %v55 = vld [vmem:[%s0 + $0x120] sm:$0xff]
    %v56 = vld [vmem:[%s0 + $0x128] sm:$0xff]
    %v57 = vld [vmem:[%s0 + $0x130] sm:$0xff]
    %v58 = vld [vmem:[%s0 + $0x138] sm:$0xff]
    %v59 = vld [vmem:[%s0 + $0x140] sm:$0xff]
    %v60 = vld [vmem:[%s0 + $0x148] sm:$0xff]
    %v61 = vld [vmem:[%s0 + $0x150] sm:$0xff]
    %v62 = vld [vmem:[%s0 + $0x158] sm:$0xff]
    %v63 = vld [vmem:[%s0 + $0x160] sm:$0xff]
    %v64 = vld [vmem:[%s0 + $0x168] sm:$0xff]
    %v65 = vld [vmem:[%s0 + $0x170] sm:$0xff]
    %v66 = vld [vmem:[%s0 + $0x178] sm:$0xff]
    %v67 = vld [vmem:[%s0 + $0x180] sm:$0xff]
    %v68 = vld [vmem:[%s0 + $0x188] sm:$0xff]
    %v69 = vld [vmem:[%s0 + $0x190] sm:$0xff]
    %v70 = vld [vmem:[%s0 + $0x198] sm:$0xff]
    %v71 = vld [vmem:[%s0 + $0x1a0] sm:$0xff]
    %v72 = vld [vmem:[%s0 + $0x1a8] sm:$0xff]
    %v73 = vld [vmem:[%s0 + $0x1b0] sm:$0xff]
    %v74 = vld [vmem:[%s0 + $0x1b8] sm:$0xff]
    %v75 = vld [vmem:[%s0 + $0x1c0] sm:$0xff]
    %v76 = vld [vmem:[%s0 + $0x1c8] sm:$0xff]
    %v77 = vld [vmem:[%s0 + $0x1d0] sm:$0xff]
    %v78 = vld [vmem:[%s0 + $0x1d8] sm:$0xff]
    %v79 = vld [vmem:[%s0 + $0x1e0] sm:$0xff]
    %v80 = vld [vmem:[%s0 + $0x1e8] sm:$0xff]
    %v81 = vld [vmem:[%s0 + $0x1f0] sm:$0xff]
    %v82 = vld [vmem:[%s0 + $0x1f8] sm:$0xff]
    %v83 = vld [vmem:[%s1] sm:$0xf]
    %v84 = vld [vmem:[%s1 + $0x4] sm:$0xf]
    %v85 = vld [vmem:[%s1 + $0x8] sm:$0xf]
    %v86 = vld [vmem:[%s1 + $0xc] sm:$0xf]
    %v87 = vld [vmem:[%s1 + $0x10] sm:$0xf]
    %v88 = vld [vmem:[%s1 + $0x14] sm:$0xf]
    %v89 = vld [vmem:[%s1 + $0x18] sm:$0xf]
    %v90 = vld [vmem:[%s1 + $0x1c] sm:$0xf]
    %v91 = vld [vmem:[%s1 + $0x20] sm:$0xf]
    %v92 = vld [vmem:[%s1 + $0x24] sm:$0xf]
    %v93 = vld [vmem:[%s1 + $0x28] sm:$0xf]
    %v94 = vld [vmem:[%s1 + $0x2c] sm:$0xf]
    %v95 = vld [vmem:[%s1 + $0x30] sm:$0xf]
    %v96 = vld [vmem:[%s1 + $0x34] sm:$0xf]
    %v97 = vld [vmem:[%s1 + $0x38] sm:$0xf]
    %v98 = vld [vmem:[%s1 + $0x3c] sm:$0xf]
    %v99 = vld [vmem:[%s1 + $0x40] sm:$0xf]
    %v100 = vld [vmem:[%s1 + $0x44] sm:$0xf]
    %v101 = vld [vmem:[%s1 + $0x48] sm:$0xf]
    %v102 = vld [vmem:[%s1 + $0x4c] sm:$0xf]
    %v103 = vld [vmem:[%s1 + $0x50] sm:$0xf]
    %v104 = vld [vmem:[%s1 + $0x54] sm:$0xf]
    %v105 = vld [vmem:[%s1 + $0x58] sm:$0xf]
    %v106 = vld [vmem:[%s1 + $0x5c] sm:$0xf]
    %v107 = vld [vmem:[%s1 + $0x60] sm:$0xf]
    %v108 = vld [vmem:[%s1 + $0x64] sm:$0xf]
    %v109 = vld [vmem:[%s1 + $0x68] sm:$0xf]
    %v110 = vld [vmem:[%s1 + $0x6c] sm:$0xf]
    %v111 = vld [vmem:[%s1 + $0x70] sm:$0xf]
    %v112 = vld [vmem:[%s1 + $0x74] sm:$0xf]
    %v113 = vld [vmem:[%s1 + $0x78] sm:$0xf]
    %v114 = vld [vmem:[%s1 + $0x7c] sm:$0xf]
    %v115 = vld [vmem:[%s2] sm:$0x1]
    %v117 = vlaneseq
    %v118 = vshrl.u32 %v117, 7
    %v119 = vsub.s32 0, %v118
    %v120 = vrot.slane %v115, %v119
    %v186 = vunpack.c.l.b16 %v19
    %v187 = vunpack.c.h.b16 %v19
    %v188 = vunpack.c.l.b16 %v20
    %v189 = vunpack.c.h.b16 %v20
    %v190 = vunpack.c.l.b16 %v21
    %v191 = vunpack.c.h.b16 %v21
    %v192 = vunpack.c.l.b16 %v22
    %v193 = vunpack.c.h.b16 %v22
    %v194 = vunpack.c.l.b16 %v23
    %v195 = vunpack.c.h.b16 %v23
    %v196 = vunpack.c.l.b16 %v24
    %v197 = vunpack.c.h.b16 %v24
    %v198 = vunpack.c.l.b16 %v25
    %v199 = vunpack.c.h.b16 %v25
    %v200 = vunpack.c.l.b16 %v26
    %v201 = vunpack.c.h.b16 %v26
    %v202 = vunpack.c.l.b16 %v27
    %v203 = vunpack.c.h.b16 %v27
    %v204 = vunpack.c.l.b16 %v28
    %v205 = vunpack.c.h.b16 %v28
    %v206 = vunpack.c.l.b16 %v29
    %v207 = vunpack.c.h.b16 %v29
    %v208 = vunpack.c.l.b16 %v30
    %v209 = vunpack.c.h.b16 %v30
    %v210 = vunpack.c.l.b16 %v31
    %v211 = vunpack.c.h.b16 %v31
    %v212 = vunpack.c.l.b16 %v32
    %v213 = vunpack.c.h.b16 %v32
    %v214 = vunpack.c.l.b16 %v33
    %v215 = vunpack.c.h.b16 %v33
    %v216 = vunpack.c.l.b16 %v34
    %v217 = vunpack.c.h.b16 %v34
    %v218 = vunpack.c.l.b16 %v35
    %v219 = vunpack.c.h.b16 %v35
    %v220 = vunpack.c.l.b16 %v36
    %v221 = vunpack.c.h.b16 %v36
    %v222 = vunpack.c.l.b16 %v37
    %v223 = vunpack.c.h.b16 %v37
    %v224 = vunpack.c.l.b16 %v38
    %v225 = vunpack.c.h.b16 %v38
    %v226 = vunpack.c.l.b16 %v39
    %v227 = vunpack.c.h.b16 %v39
    %v228 = vunpack.c.l.b16 %v40
    %v229 = vunpack.c.h.b16 %v40
    %v230 = vunpack.c.l.b16 %v41
    %v231 = vunpack.c.h.b16 %v41
    %v232 = vunpack.c.l.b16 %v42
    %v233 = vunpack.c.h.b16 %v42
    %v234 = vunpack.c.l.b16 %v43
    %v235 = vunpack.c.h.b16 %v43
    %v236 = vunpack.c.l.b16 %v44
    %v237 = vunpack.c.h.b16 %v44
    %v238 = vunpack.c.l.b16 %v45
    %v239 = vunpack.c.h.b16 %v45
    %v240 = vunpack.c.l.b16 %v46
    %v241 = vunpack.c.h.b16 %v46
    %v242 = vunpack.c.l.b16 %v47
    %v243 = vunpack.c.h.b16 %v47
    %v244 = vunpack.c.l.b16 %v48
    %v245 = vunpack.c.h.b16 %v48
    %v246 = vunpack.c.l.b16 %v49
    %v247 = vunpack.c.h.b16 %v49
    %v248 = vunpack.c.l.b16 %v50
    %v249 = vunpack.c.h.b16 %v50
    %v250 = vunpack.c.l.b16 %v51
    %v251 = vunpack.c.h.b16 %v51
    %v252 = vunpack.c.l.b16 %v52
    %v253 = vunpack.c.h.b16 %v52
    %v254 = vunpack.c.l.b16 %v53
    %v255 = vunpack.c.h.b16 %v53
    %v256 = vunpack.c.l.b16 %v54
    %v257 = vunpack.c.h.b16 %v54
    %v258 = vunpack.c.l.b16 %v55
    %v259 = vunpack.c.h.b16 %v55
    %v260 = vunpack.c.l.b16 %v56
    %v261 = vunpack.c.h.b16 %v56
    %v262 = vunpack.c.l.b16 %v57
    %v263 = vunpack.c.h.b16 %v57
    %v264 = vunpack.c.l.b16 %v58
    %v265 = vunpack.c.h.b16 %v58
    %v266 = vunpack.c.l.b16 %v59
    %v267 = vunpack.c.h.b16 %v59
    %v268 = vunpack.c.l.b16 %v60
    %v269 = vunpack.c.h.b16 %v60
    %v270 = vunpack.c.l.b16 %v61
    %v271 = vunpack.c.h.b16 %v61
    %v272 = vunpack.c.l.b16 %v62
    %v273 = vunpack.c.h.b16 %v62
    %v274 = vunpack.c.l.b16 %v63
    %v275 = vunpack.c.h.b16 %v63
    %v276 = vunpack.c.l.b16 %v64
    %v277 = vunpack.c.h.b16 %v64
    %v278 = vunpack.c.l.b16 %v65
    %v279 = vunpack.c.h.b16 %v65
    %v280 = vunpack.c.l.b16 %v66
    %v281 = vunpack.c.h.b16 %v66
    %v282 = vunpack.c.l.b16 %v67
    %v283 = vunpack.c.h.b16 %v67
    %v284 = vunpack.c.l.b16 %v68
    %v285 = vunpack.c.h.b16 %v68
    %v286 = vunpack.c.l.b16 %v69
    %v287 = vunpack.c.h.b16 %v69
    %v288 = vunpack.c.l.b16 %v70
    %v289 = vunpack.c.h.b16 %v70
    %v290 = vunpack.c.l.b16 %v71
    %v291 = vunpack.c.h.b16 %v71
    %v292 = vunpack.c.l.b16 %v72
    %v293 = vunpack.c.h.b16 %v72
    %v294 = vunpack.c.l.b16 %v73
    %v295 = vunpack.c.h.b16 %v73
    %v296 = vunpack.c.l.b16 %v74
    %v297 = vunpack.c.h.b16 %v74
    %v298 = vunpack.c.l.b16 %v75
    %v299 = vunpack.c.h.b16 %v75
    %v300 = vunpack.c.l.b16 %v76
    %v301 = vunpack.c.h.b16 %v76
    %v302 = vunpack.c.l.b16 %v77
    %v303 = vunpack.c.h.b16 %v77
    %v304 = vunpack.c.l.b16 %v78
    %v305 = vunpack.c.h.b16 %v78
    %v306 = vunpack.c.l.b16 %v79
    %v307 = vunpack.c.h.b16 %v79
    %v308 = vunpack.c.l.b16 %v80
    %v309 = vunpack.c.h.b16 %v80
    %v310 = vunpack.c.l.b16 %v81
    %v311 = vunpack.c.h.b16 %v81
    %v312 = vunpack.c.l.b16 %v82
    %v313 = vunpack.c.h.b16 %v82
    %v314 = vpack.c.b16 %v188, %v186
    %v315 = vpack.c.b16 %v189, %v187
    %v316 = vpack.c.b16 %v192, %v190
    %v317 = vpack.c.b16 %v193, %v191
    %v318 = vpack.c.b16 %v196, %v194
    %v319 = vpack.c.b16 %v197, %v195
    %v320 = vpack.c.b16 %v200, %v198
    %v321 = vpack.c.b16 %v201, %v199
    %v322 = vpack.c.b16 %v204, %v202
    %v323 = vpack.c.b16 %v205, %v203
    %v324 = vpack.c.b16 %v208, %v206
    %v325 = vpack.c.b16 %v209, %v207
    %v326 = vpack.c.b16 %v212, %v210
    %v327 = vpack.c.b16 %v213, %v211
    %v328 = vpack.c.b16 %v216, %v214
    %v329 = vpack.c.b16 %v217, %v215
    %v330 = vpack.c.b16 %v220, %v218
    %v331 = vpack.c.b16 %v221, %v219
    %v332 = vpack.c.b16 %v224, %v222
    %v333 = vpack.c.b16 %v225, %v223
    %v334 = vpack.c.b16 %v228, %v226
    %v335 = vpack.c.b16 %v229, %v227
    %v336 = vpack.c.b16 %v232, %v230
    %v337 = vpack.c.b16 %v233, %v231
    %v338 = vpack.c.b16 %v236, %v234
    %v339 = vpack.c.b16 %v237, %v235
    %v340 = vpack.c.b16 %v240, %v238
    %v341 = vpack.c.b16 %v241, %v239
    %v342 = vpack.c.b16 %v244, %v242
    %v343 = vpack.c.b16 %v245, %v243
    %v344 = vpack.c.b16 %v248, %v246
    %v345 = vpack.c.b16 %v249, %v247
    %v346 = vpack.c.b16 %v252, %v250
    %v347 = vpack.c.b16 %v253, %v251
    %v348 = vpack.c.b16 %v256, %v254
    %v349 = vpack.c.b16 %v257, %v255
    %v350 = vpack.c.b16 %v260, %v258
    %v351 = vpack.c.b16 %v261, %v259
    %v352 = vpack.c.b16 %v264, %v262
    %v353 = vpack.c.b16 %v265, %v263
    %v354 = vpack.c.b16 %v268, %v266
    %v355 = vpack.c.b16 %v269, %v267
    %v356 = vpack.c.b16 %v272, %v270
    %v357 = vpack.c.b16 %v273, %v271
    %v358 = vpack.c.b16 %v276, %v274
    %v359 = vpack.c.b16 %v277, %v275
    %v360 = vpack.c.b16 %v280, %v278
    %v361 = vpack.c.b16 %v281, %v279
    %v362 = vpack.c.b16 %v284, %v282
    %v363 = vpack.c.b16 %v285, %v283
    %v364 = vpack.c.b16 %v288, %v286
    %v365 = vpack.c.b16 %v289, %v287
    %v366 = vpack.c.b16 %v292, %v290
    %v367 = vpack.c.b16 %v293, %v291
    %v368 = vpack.c.b16 %v296, %v294
    %v369 = vpack.c.b16 %v297, %v295
    %v370 = vpack.c.b16 %v300, %v298
    %v371 = vpack.c.b16 %v301, %v299
    %v372 = vpack.c.b16 %v304, %v302
    %v373 = vpack.c.b16 %v305, %v303
    %v374 = vpack.c.b16 %v308, %v306
    %v375 = vpack.c.b16 %v309, %v307
    %v376 = vpack.c.b16 %v312, %v310
    %v377 = vpack.c.b16 %v313, %v311
    %v474 = vunpack.c.l.b16 %v83
    %v475 = vunpack.c.l.b16 %v84
    %v476 = vunpack.c.l.b16 %v85
    %v477 = vunpack.c.l.b16 %v86
    %v478 = vunpack.c.l.b16 %v87
    %v479 = vunpack.c.l.b16 %v88
    %v480 = vunpack.c.l.b16 %v89
    %v481 = vunpack.c.l.b16 %v90
    %v482 = vunpack.c.l.b16 %v91
    %v483 = vunpack.c.l.b16 %v92
    %v484 = vunpack.c.l.b16 %v93
    %v485 = vunpack.c.l.b16 %v94
    %v486 = vunpack.c.l.b16 %v95
    %v487 = vunpack.c.l.b16 %v96
    %v488 = vunpack.c.l.b16 %v97
    %v489 = vunpack.c.l.b16 %v98
    %v490 = vunpack.c.l.b16 %v99
    %v491 = vunpack.c.l.b16 %v100
    %v492 = vunpack.c.l.b16 %v101
    %v493 = vunpack.c.l.b16 %v102
    %v494 = vunpack.c.l.b16 %v103
    %v495 = vunpack.c.l.b16 %v104
    %v496 = vunpack.c.l.b16 %v105
    %v497 = vunpack.c.l.b16 %v106
    %v498 = vunpack.c.l.b16 %v107
    %v499 = vunpack.c.l.b16 %v108
    %v500 = vunpack.c.l.b16 %v109
    %v501 = vunpack.c.l.b16 %v110
    %v502 = vunpack.c.l.b16 %v111
    %v503 = vunpack.c.l.b16 %v112
    %v504 = vunpack.c.l.b16 %v113
    %v505 = vunpack.c.l.b16 %v114
    %v506 = vpack.c.b16 %v475, %v474
    %v507 = vpack.c.b16 %v477, %v476
    %v508 = vpack.c.b16 %v479, %v478
    %v509 = vpack.c.b16 %v481, %v480
    %v510 = vpack.c.b16 %v483, %v482
    %v511 = vpack.c.b16 %v485, %v484
    %v512 = vpack.c.b16 %v487, %v486
    %v513 = vpack.c.b16 %v489, %v488
    %v514 = vpack.c.b16 %v491, %v490
    %v515 = vpack.c.b16 %v493, %v492
    %v516 = vpack.c.b16 %v495, %v494
    %v517 = vpack.c.b16 %v497, %v496
    %v518 = vpack.c.b16 %v499, %v498
    %v519 = vpack.c.b16 %v501, %v500
    %v520 = vpack.c.b16 %v503, %v502
    %v521 = vpack.c.b16 %v505, %v504
    %538 = vmatprep.subr.bf16.mxu0 0
    %539 = vmatpush1.bf16.msra.mxu0 %v506
    %540 = vmatprep.subr.bf16.mxu0 0
    %541 = vmatpush1.bf16.msra.mxu0 %v507
    %542 = vmatprep.subr.bf16.mxu0 0
    %543 = vmatpush1.bf16.msra.mxu0 %v508
    %544 = vmatprep.subr.bf16.mxu0 0
    %545 = vmatpush1.bf16.msra.mxu0 %v509
    %546 = vmatprep.subr.bf16.mxu0 0
    %547 = vmatpush1.bf16.msra.mxu0 %v510
    %548 = vmatprep.subr.bf16.mxu0 0
    %549 = vmatpush1.bf16.msra.mxu0 %v511
    %550 = vmatprep.subr.bf16.mxu0 0
    %551 = vmatpush1.bf16.msra.mxu0 %v512
    %552 = vmatprep.subr.bf16.mxu0 0
    %553 = vmatpush1.bf16.msra.mxu0 %v513
    %554 = vmatprep.subr.bf16.mxu0 0
    %555 = vmatpush1.bf16.msra.mxu0 %v514
    %556 = vmatprep.subr.bf16.mxu0 0
    %557 = vmatpush1.bf16.msra.mxu0 %v515
    %558 = vmatprep.subr.bf16.mxu0 0
    %559 = vmatpush1.bf16.msra.mxu0 %v516
    %560 = vmatprep.subr.bf16.mxu0 0
    %561 = vmatpush1.bf16.msra.mxu0 %v517
    %562 = vmatprep.subr.bf16.mxu0 0
    %563 = vmatpush1.bf16.msra.mxu0 %v518
    %564 = vmatprep.subr.bf16.mxu0 0
    %565 = vmatpush1.bf16.msra.mxu0 %v519
    %566 = vmatprep.subr.bf16.mxu0 0
    %567 = vmatpush1.bf16.msra.mxu0 %v520
    %568 = vmatprep.subr.bf16.mxu0 0
    %569 = vmatpush1.bf16.msra.mxu0 %v521
    %570 = vmatprep.mubr.bf16.mxu0 %v315
    %571 = vmatmul.mubr.bf16.gmra.mrb[0].mxu0 %v314
    %v572 = vpop.f32.mrb[0].mxu0
    %v573 = vadd.f32 %v120, %v572
    %v574 = vpop.f32.mrb[0].mxu0
    %v575 = vpop.f32.mrb[0].mxu0
    %v576 = vadd.f32 %v120, %v575
    %v577 = vpop.f32.mrb[0].mxu0
    %578 = vmatprep.mubr.bf16.mxu0 %v317
    %579 = vmatmul.mubr.bf16.gmra.mrb[0].mxu0 %v316
    %v580 = vpop.f32.mrb[0].mxu0
    %v581 = vadd.f32 %v120, %v580
    %v582 = vpop.f32.mrb[0].mxu0
    %v583 = vpop.f32.mrb[0].mxu0
    %v584 = vadd.f32 %v120, %v583
    %v585 = vpop.f32.mrb[0].mxu0
    %586 = vmatprep.mubr.bf16.mxu0 %v319
    %587 = vmatmul.mubr.bf16.gmra.mrb[0].mxu0 %v318
    %v588 = vpop.f32.mrb[0].mxu0
    %v589 = vadd.f32 %v120, %v588
    %v590 = vpop.f32.mrb[0].mxu0
    %v591 = vpop.f32.mrb[0].mxu0
    %v592 = vadd.f32 %v120, %v591
    %v593 = vpop.f32.mrb[0].mxu0
    %594 = vmatprep.mubr.bf16.mxu0 %v321
    %595 = vmatmul.mubr.bf16.gmra.mrb[0].mxu0 %v320
    %v596 = vpop.f32.mrb[0].mxu0
    %v597 = vadd.f32 %v120, %v596
    %v598 = vpop.f32.mrb[0].mxu0
    %v599 = vpop.f32.mrb[0].mxu0
    %v600 = vadd.f32 %v120, %v599
    %v601 = vpop.f32.mrb[0].mxu0
    %602 = vmatprep.mubr.bf16.mxu0 %v323
    %603 = vmatmul.mubr.bf16.gmra.mrb[0].mxu0 %v322
    %v604 = vpop.f32.mrb[0].mxu0
    %v605 = vadd.f32 %v120, %v604
    %v606 = vpop.f32.mrb[0].mxu0
    %v607 = vpop.f32.mrb[0].mxu0
    %v608 = vadd.f32 %v120, %v607
    %v609 = vpop.f32.mrb[0].mxu0
    %610 = vmatprep.mubr.bf16.mxu0 %v325
    %611 = vmatmul.mubr.bf16.gmra.mrb[0].mxu0 %v324
    %v612 = vpop.f32.mrb[0].mxu0
    %v613 = vadd.f32 %v120, %v612
    %v614 = vpop.f32.mrb[0].mxu0
    %v615 = vpop.f32.mrb[0].mxu0
    %v616 = vadd.f32 %v120, %v615
    %v617 = vpop.f32.mrb[0].mxu0
    %618 = vmatprep.mubr.bf16.mxu0 %v327
    %619 = vmatmul.mubr.bf16.gmra.mrb[0].mxu0 %v326
    %v620 = vpop.f32.mrb[0].mxu0
    %v621 = vadd.f32 %v120, %v620
    %v622 = vpop.f32.mrb[0].mxu0
    %v623 = vpop.f32.mrb[0].mxu0
    %v624 = vadd.f32 %v120, %v623
    %v625 = vpop.f32.mrb[0].mxu0
    %626 = vmatprep.mubr.bf16.mxu0 %v329
    %627 = vmatmul.mubr.bf16.gmra.mrb[0].mxu0 %v328
    %v628 = vpop.f32.mrb[0].mxu0
    %v629 = vadd.f32 %v120, %v628
    %v630 = vpop.f32.mrb[0].mxu0
    %v631 = vpop.f32.mrb[0].mxu0
    %v632 = vadd.f32 %v120, %v631
    %v633 = vpop.f32.mrb[0].mxu0
    %634 = vmatprep.mubr.bf16.mxu0 %v331
    %635 = vmatmul.mubr.bf16.gmra.mrb[0].mxu0 %v330
    %v636 = vpop.f32.mrb[0].mxu0
    %v637 = vadd.f32 %v120, %v636
    %v638 = vpop.f32.mrb[0].mxu0
    %v639 = vpop.f32.mrb[0].mxu0
    %v640 = vadd.f32 %v120, %v639
    %v641 = vpop.f32.mrb[0].mxu0
    %642 = vmatprep.mubr.bf16.mxu0 %v333
    %643 = vmatmul.mubr.bf16.gmra.mrb[0].mxu0 %v332
    %v644 = vpop.f32.mrb[0].mxu0
    %v645 = vadd.f32 %v120, %v644
    %v646 = vpop.f32.mrb[0].mxu0
    %v647 = vpop.f32.mrb[0].mxu0
    %v648 = vadd.f32 %v120, %v647
    %v649 = vpop.f32.mrb[0].mxu0
    %650 = vmatprep.mubr.bf16.mxu0 %v335
    %651 = vmatmul.mubr.bf16.gmra.mrb[0].mxu0 %v334
    %v652 = vpop.f32.mrb[0].mxu0
    %v653 = vadd.f32 %v120, %v652
    %v654 = vpop.f32.mrb[0].mxu0
    %v655 = vpop.f32.mrb[0].mxu0
    %v656 = vadd.f32 %v120, %v655
    %v657 = vpop.f32.mrb[0].mxu0
    %658 = vmatprep.mubr.bf16.mxu0 %v337
    %659 = vmatmul.mubr.bf16.gmra.mrb[0].mxu0 %v336
    %v660 = vpop.f32.mrb[0].mxu0
    %v661 = vadd.f32 %v120, %v660
    %v662 = vpop.f32.mrb[0].mxu0
    %v663 = vpop.f32.mrb[0].mxu0
    %v664 = vadd.f32 %v120, %v663
    %v665 = vpop.f32.mrb[0].mxu0
    %666 = vmatprep.mubr.bf16.mxu0 %v339
    %667 = vmatmul.mubr.bf16.gmra.mrb[0].mxu0 %v338
    %v668 = vpop.f32.mrb[0].mxu0
    %v669 = vadd.f32 %v120, %v668
    %v670 = vpop.f32.mrb[0].mxu0
    %v671 = vpop.f32.mrb[0].mxu0
    %v672 = vadd.f32 %v120, %v671
    %v673 = vpop.f32.mrb[0].mxu0
    %674 = vmatprep.mubr.bf16.mxu0 %v341
    %675 = vmatmul.mubr.bf16.gmra.mrb[0].mxu0 %v340
    %v676 = vpop.f32.mrb[0].mxu0
    %v677 = vadd.f32 %v120, %v676
    %v678 = vpop.f32.mrb[0].mxu0
    %v679 = vpop.f32.mrb[0].mxu0
    %v680 = vadd.f32 %v120, %v679
    %v681 = vpop.f32.mrb[0].mxu0
    %682 = vmatprep.mubr.bf16.mxu0 %v343
    %683 = vmatmul.mubr.bf16.gmra.mrb[0].mxu0 %v342
    %v684 = vpop.f32.mrb[0].mxu0
    %v685 = vadd.f32 %v120, %v684
    %v686 = vpop.f32.mrb[0].mxu0
    %v687 = vpop.f32.mrb[0].mxu0
    %v688 = vadd.f32 %v120, %v687
    %v689 = vpop.f32.mrb[0].mxu0
    %690 = vmatprep.mubr.bf16.mxu0 %v345
    %691 = vmatmul.mubr.bf16.gmra.mrb[0].mxu0 %v344
    %v692 = vpop.f32.mrb[0].mxu0
    %v693 = vadd.f32 %v120, %v692
    %v694 = vpop.f32.mrb[0].mxu0
    %v695 = vpop.f32.mrb[0].mxu0
    %v696 = vadd.f32 %v120, %v695
    %v697 = vpop.f32.mrb[0].mxu0
    %698 = vmatprep.mubr.bf16.mxu0 %v347
    %699 = vmatmul.mubr.bf16.gmra.mrb[0].mxu0 %v346
    %v700 = vpop.f32.mrb[0].mxu0
    %v701 = vadd.f32 %v120, %v700
    %v702 = vpop.f32.mrb[0].mxu0
    %v703 = vpop.f32.mrb[0].mxu0
    %v704 = vadd.f32 %v120, %v703
    %v705 = vpop.f32.mrb[0].mxu0
    %706 = vmatprep.mubr.bf16.mxu0 %v349
    %707 = vmatmul.mubr.bf16.gmra.mrb[0].mxu0 %v348
    %v708 = vpop.f32.mrb[0].mxu0
    %v709 = vadd.f32 %v120, %v708
    %v710 = vpop.f32.mrb[0].mxu0
    %v711 = vpop.f32.mrb[0].mxu0
    %v712 = vadd.f32 %v120, %v711
    %v713 = vpop.f32.mrb[0].mxu0
    %714 = vmatprep.mubr.bf16.mxu0 %v351
    %715 = vmatmul.mubr.bf16.gmra.mrb[0].mxu0 %v350
    %v716 = vpop.f32.mrb[0].mxu0
    %v717 = vadd.f32 %v120, %v716
    %v718 = vpop.f32.mrb[0].mxu0
    %v719 = vpop.f32.mrb[0].mxu0
    %v720 = vadd.f32 %v120, %v719
    %v721 = vpop.f32.mrb[0].mxu0
    %722 = vmatprep.mubr.bf16.mxu0 %v353
    %723 = vmatmul.mubr.bf16.gmra.mrb[0].mxu0 %v352
    %v724 = vpop.f32.mrb[0].mxu0
    %v725 = vadd.f32 %v120, %v724
    %v726 = vpop.f32.mrb[0].mxu0
    %v727 = vpop.f32.mrb[0].mxu0
    %v728 = vadd.f32 %v120, %v727
    %v729 = vpop.f32.mrb[0].mxu0
    %730 = vmatprep.mubr.bf16.mxu0 %v355
    %731 = vmatmul.mubr.bf16.gmra.mrb[0].mxu0 %v354
    %v732 = vpop.f32.mrb[0].mxu0
    %v733 = vadd.f32 %v120, %v732
    %v734 = vpop.f32.mrb[0].mxu0
    %v735 = vpop.f32.mrb[0].mxu0
    %v736 = vadd.f32 %v120, %v735
    %v737 = vpop.f32.mrb[0].mxu0
    %738 = vmatprep.mubr.bf16.mxu0 %v357
    %739 = vmatmul.mubr.bf16.gmra.mrb[0].mxu0 %v356
    %v740 = vpop.f32.mrb[0].mxu0
    %v741 = vadd.f32 %v120, %v740
    %v742 = vpop.f32.mrb[0].mxu0
    %v743 = vpop.f32.mrb[0].mxu0
    %v744 = vadd.f32 %v120, %v743
    %v745 = vpop.f32.mrb[0].mxu0
    %746 = vmatprep.mubr.bf16.mxu0 %v359
    %747 = vmatmul.mubr.bf16.gmra.mrb[0].mxu0 %v358
    %v748 = vpop.f32.mrb[0].mxu0
    %v749 = vadd.f32 %v120, %v748
    %v750 = vpop.f32.mrb[0].mxu0
    %v751 = vpop.f32.mrb[0].mxu0
    %v752 = vadd.f32 %v120, %v751
    %v753 = vpop.f32.mrb[0].mxu0
    %754 = vmatprep.mubr.bf16.mxu0 %v361
    %755 = vmatmul.mubr.bf16.gmra.mrb[0].mxu0 %v360
    %v756 = vpop.f32.mrb[0].mxu0
    %v757 = vadd.f32 %v120, %v756
    %v758 = vpop.f32.mrb[0].mxu0
    %v759 = vpop.f32.mrb[0].mxu0
    %v760 = vadd.f32 %v120, %v759
    %v761 = vpop.f32.mrb[0].mxu0
    %762 = vmatprep.mubr.bf16.mxu0 %v363
    %763 = vmatmul.mubr.bf16.gmra.mrb[0].mxu0 %v362
    %v764 = vpop.f32.mrb[0].mxu0
    %v765 = vadd.f32 %v120, %v764
    %v766 = vpop.f32.mrb[0].mxu0
    %v767 = vpop.f32.mrb[0].mxu0
    %v768 = vadd.f32 %v120, %v767
    %v769 = vpop.f32.mrb[0].mxu0
    %770 = vmatprep.mubr.bf16.mxu0 %v365
    %771 = vmatmul.mubr.bf16.gmra.mrb[0].mxu0 %v364
    %v772 = vpop.f32.mrb[0].mxu0
    %v773 = vadd.f32 %v120, %v772
    %v774 = vpop.f32.mrb[0].mxu0
    %v775 = vpop.f32.mrb[0].mxu0
    %v776 = vadd.f32 %v120, %v775
    %v777 = vpop.f32.mrb[0].mxu0
    %778 = vmatprep.mubr.bf16.mxu0 %v367
    %779 = vmatmul.mubr.bf16.gmra.mrb[0].mxu0 %v366
    %v780 = vpop.f32.mrb[0].mxu0
    %v781 = vadd.f32 %v120, %v780
    %v782 = vpop.f32.mrb[0].mxu0
    %v783 = vpop.f32.mrb[0].mxu0
    %v784 = vadd.f32 %v120, %v783
    %v785 = vpop.f32.mrb[0].mxu0
    %786 = vmatprep.mubr.bf16.mxu0 %v369
    %787 = vmatmul.mubr.bf16.gmra.mrb[0].mxu0 %v368
    %v788 = vpop.f32.mrb[0].mxu0
    %v789 = vadd.f32 %v120, %v788
    %v790 = vpop.f32.mrb[0].mxu0
    %v791 = vpop.f32.mrb[0].mxu0
    %v792 = vadd.f32 %v120, %v791
    %v793 = vpop.f32.mrb[0].mxu0
    %794 = vmatprep.mubr.bf16.mxu0 %v371
    %795 = vmatmul.mubr.bf16.gmra.mrb[0].mxu0 %v370
    %v796 = vpop.f32.mrb[0].mxu0
    %v797 = vadd.f32 %v120, %v796
    %v798 = vpop.f32.mrb[0].mxu0
    %v799 = vpop.f32.mrb[0].mxu0
    %v800 = vadd.f32 %v120, %v799
    %v801 = vpop.f32.mrb[0].mxu0
    %802 = vmatprep.mubr.bf16.mxu0 %v373
    %803 = vmatmul.mubr.bf16.gmra.mrb[0].mxu0 %v372
    %v804 = vpop.f32.mrb[0].mxu0
    %v805 = vadd.f32 %v120, %v804
    %v806 = vpop.f32.mrb[0].mxu0
    %v807 = vpop.f32.mrb[0].mxu0
    %v808 = vadd.f32 %v120, %v807
    %v809 = vpop.f32.mrb[0].mxu0
    %810 = vmatprep.mubr.bf16.mxu0 %v375
    %811 = vmatmul.mubr.bf16.gmra.mrb[0].mxu0 %v374
    %v812 = vpop.f32.mrb[0].mxu0
    %v813 = vadd.f32 %v120, %v812
    %v814 = vpop.f32.mrb[0].mxu0
    %v815 = vpop.f32.mrb[0].mxu0
    %v816 = vadd.f32 %v120, %v815
    %v817 = vpop.f32.mrb[0].mxu0
    %818 = vmatprep.mubr.bf16.mxu0 %v377
    %819 = vmatmul.mubr.bf16.gmra.mrb[0].mxu0 %v376
    %v820 = vpop.f32.mrb[0].mxu0
    %v821 = vadd.f32 %v120, %v820
    %v822 = vpop.f32.mrb[0].mxu0
    %v823 = vpop.f32.mrb[0].mxu0
    %v824 = vadd.f32 %v120, %v823
    %v825 = vpop.f32.mrb[0].mxu0
    %826 = vdwg.mxu0
    %vm827 = vcmp.gt.f32.partialorder %v573, 0.0
    %vm828 = vcmp.gt.f32.partialorder %v576, 0.0
    %vm829 = vcmp.gt.f32.partialorder %v581, 0.0
    %vm830 = vcmp.gt.f32.partialorder %v584, 0.0
    %vm831 = vcmp.gt.f32.partialorder %v589, 0.0
    %vm832 = vcmp.gt.f32.partialorder %v592, 0.0
    %vm833 = vcmp.gt.f32.partialorder %v597, 0.0
    %vm834 = vcmp.gt.f32.partialorder %v600, 0.0
    %vm835 = vcmp.gt.f32.partialorder %v605, 0.0
    %vm836 = vcmp.gt.f32.partialorder %v608, 0.0
    %vm837 = vcmp.gt.f32.partialorder %v613, 0.0
    %vm838 = vcmp.gt.f32.partialorder %v616, 0.0
    %vm839 = vcmp.gt.f32.partialorder %v621, 0.0
    %vm840 = vcmp.gt.f32.partialorder %v624, 0.0
    %vm841 = vcmp.gt.f32.partialorder %v629, 0.0
    %vm842 = vcmp.gt.f32.partialorder %v632, 0.0
    %vm843 = vcmp.gt.f32.partialorder %v637, 0.0
    %vm844 = vcmp.gt.f32.partialorder %v640, 0.0
    %vm845 = vcmp.gt.f32.partialorder %v645, 0.0
    %vm846 = vcmp.gt.f32.partialorder %v648, 0.0
    %vm847 = vcmp.gt.f32.partialorder %v653, 0.0
    %vm848 = vcmp.gt.f32.partialorder %v656, 0.0
    %vm849 = vcmp.gt.f32.partialorder %v661, 0.0
    %vm850 = vcmp.gt.f32.partialorder %v664, 0.0
    %vm851 = vcmp.gt.f32.partialorder %v669, 0.0
    %vm852 = vcmp.gt.f32.partialorder %v672, 0.0
    %vm853 = vcmp.gt.f32.partialorder %v677, 0.0
    %vm854 = vcmp.gt.f32.partialorder %v680, 0.0
    %vm855 = vcmp.gt.f32.partialorder %v685, 0.0
    %vm856 = vcmp.gt.f32.partialorder %v688, 0.0
    %vm857 = vcmp.gt.f32.partialorder %v693, 0.0
    %vm858 = vcmp.gt.f32.partialorder %v696, 0.0
    %vm859 = vcmp.gt.f32.partialorder %v701, 0.0
    %vm860 = vcmp.gt.f32.partialorder %v704, 0.0
    %vm861 = vcmp.gt.f32.partialorder %v709, 0.0
    %vm862 = vcmp.gt.f32.partialorder %v712, 0.0
    %vm863 = vcmp.gt.f32.partialorder %v717, 0.0
    %vm864 = vcmp.gt.f32.partialorder %v720, 0.0
    %vm865 = vcmp.gt.f32.partialorder %v725, 0.0
    %vm866 = vcmp.gt.f32.partialorder %v728, 0.0
    %vm867 = vcmp.gt.f32.partialorder %v733, 0.0
    %vm868 = vcmp.gt.f32.partialorder %v736, 0.0
    %vm869 = vcmp.gt.f32.partialorder %v741, 0.0
    %vm870 = vcmp.gt.f32.partialorder %v744, 0.0
    %vm871 = vcmp.gt.f32.partialorder %v749, 0.0
    %vm872 = vcmp.gt.f32.partialorder %v752, 0.0
    %vm873 = vcmp.gt.f32.partialorder %v757, 0.0
    %vm874 = vcmp.gt.f32.partialorder %v760, 0.0
    %vm875 = vcmp.gt.f32.partialorder %v765, 0.0
    %vm876 = vcmp.gt.f32.partialorder %v768, 0.0
    %vm877 = vcmp.gt.f32.partialorder %v773, 0.0
    %vm878 = vcmp.gt.f32.partialorder %v776, 0.0
    %vm879 = vcmp.gt.f32.partialorder %v781, 0.0
    %vm880 = vcmp.gt.f32.partialorder %v784, 0.0
    %vm881 = vcmp.gt.f32.partialorder %v789, 0.0
    %vm882 = vcmp.gt.f32.partialorder %v792, 0.0
    %vm883 = vcmp.gt.f32.partialorder %v797, 0.0
    %vm884 = vcmp.gt.f32.partialorder %v800, 0.0
    %vm885 = vcmp.gt.f32.partialorder %v805, 0.0
    %vm886 = vcmp.gt.f32.partialorder %v808, 0.0
    %vm887 = vcmp.gt.f32.partialorder %v813, 0.0
    %vm888 = vcmp.gt.f32.partialorder %v816, 0.0
    %vm889 = vcmp.gt.f32.partialorder %v821, 0.0
    %vm890 = vcmp.gt.f32.partialorder %v824, 0.0
    %v891 = vld [vmem:[%s3] sm:$0x1]
    %v893 = vlaneseq
    %v894 = vshrl.u32 %v893, 7
    %v895 = vsub.s32 0, %v894
    %v896 = vrot.slane %v891, %v895
    %v898 = vmul.f32 %v896, %v573
    %v899 = vmul.f32 %v896, %v576
    %v900 = vmul.f32 %v896, %v581
    %v901 = vmul.f32 %v896, %v584
    %v902 = vmul.f32 %v896, %v589
    %v903 = vmul.f32 %v896, %v592
    %v904 = vmul.f32 %v896, %v597
    %v905 = vmul.f32 %v896, %v600
    %v906 = vmul.f32 %v896, %v605
    %v907 = vmul.f32 %v896, %v608
    %v908 = vmul.f32 %v896, %v613
    %v909 = vmul.f32 %v896, %v616
    %v910 = vmul.f32 %v896, %v621
    %v911 = vmul.f32 %v896, %v624
    %v912 = vmul.f32 %v896, %v629
    %v913 = vmul.f32 %v896, %v632
    %v914 = vmul.f32 %v896, %v637
    %v915 = vmul.f32 %v896, %v640
    %v916 = vmul.f32 %v896, %v645
    %v917 = vmul.f32 %v896, %v648
    %v918 = vmul.f32 %v896, %v653
    %v919 = vmul.f32 %v896, %v656
    %v920 = vmul.f32 %v896, %v661
    %v921 = vmul.f32 %v896, %v664
    %v922 = vmul.f32 %v896, %v669
    %v923 = vmul.f32 %v896, %v672
    %v924 = vmul.f32 %v896, %v677
    %v925 = vmul.f32 %v896, %v680
    %v926 = vmul.f32 %v896, %v685
    %v927 = vmul.f32 %v896, %v688
    %v928 = vmul.f32 %v896, %v693
    %v929 = vmul.f32 %v896, %v696
    %v930 = vmul.f32 %v896, %v701
    %v931 = vmul.f32 %v896, %v704
    %v932 = vmul.f32 %v896, %v709
    %v933 = vmul.f32 %v896, %v712
    %v934 = vmul.f32 %v896, %v717
    %v935 = vmul.f32 %v896, %v720
    %v936 = vmul.f32 %v896, %v725
    %v937 = vmul.f32 %v896, %v728
    %v938 = vmul.f32 %v896, %v733
    %v939 = vmul.f32 %v896, %v736
    %v940 = vmul.f32 %v896, %v741
    %v941 = vmul.f32 %v896, %v744
    %v942 = vmul.f32 %v896, %v749
    %v943 = vmul.f32 %v896, %v752
    %v944 = vmul.f32 %v896, %v757
    %v945 = vmul.f32 %v896, %v760
    %v946 = vmul.f32 %v896, %v765
    %v947 = vmul.f32 %v896, %v768
    %v948 = vmul.f32 %v896, %v773
    %v949 = vmul.f32 %v896, %v776
    %v950 = vmul.f32 %v896, %v781
    %v951 = vmul.f32 %v896, %v784
    %v952 = vmul.f32 %v896, %v789
    %v953 = vmul.f32 %v896, %v792
    %v954 = vmul.f32 %v896, %v797
    %v955 = vmul.f32 %v896, %v800
    %v956 = vmul.f32 %v896, %v805
    %v957 = vmul.f32 %v896, %v808
    %v958 = vmul.f32 %v896, %v813
    %v959 = vmul.f32 %v896, %v816
    %v960 = vmul.f32 %v896, %v821
    %v961 = vmul.f32 %v896, %v824
    %v962 = vsel %vm827, %v573, %v898
    %v963 = vsel %vm828, %v576, %v899
    %v964 = vsel %vm829, %v581, %v900
    %v965 = vsel %vm830, %v584, %v901
    %v966 = vsel %vm831, %v589, %v902
    %v967 = vsel %vm832, %v592, %v903
    %v968 = vsel %vm833, %v597, %v904
    %v969 = vsel %vm834, %v600, %v905
    %v970 = vsel %vm835, %v605, %v906
    %v971 = vsel %vm836, %v608, %v907
    %v972 = vsel %vm837, %v613, %v908
    %v973 = vsel %vm838, %v616, %v909
    %v974 = vsel %vm839, %v621, %v910
    %v975 = vsel %vm840, %v624, %v911
    %v976 = vsel %vm841, %v629, %v912
    %v977 = vsel %vm842, %v632, %v913
    %v978 = vsel %vm843, %v637, %v914
    %v979 = vsel %vm844, %v640, %v915
    %v980 = vsel %vm845, %v645, %v916
    %v981 = vsel %vm846, %v648, %v917
    %v982 = vsel %vm847, %v653, %v918
    %v983 = vsel %vm848, %v656, %v919
    %v984 = vsel %vm849, %v661, %v920
    %v985 = vsel %vm850, %v664, %v921
    %v986 = vsel %vm851, %v669, %v922
    %v987 = vsel %vm852, %v672, %v923
    %v988 = vsel %vm853, %v677, %v924
    %v989 = vsel %vm854, %v680, %v925
    %v990 = vsel %vm855, %v685, %v926
    %v991 = vsel %vm856, %v688, %v927
    %v992 = vsel %vm857, %v693, %v928
    %v993 = vsel %vm858, %v696, %v929
    %v994 = vsel %vm859, %v701, %v930
    %v995 = vsel %vm860, %v704, %v931
    %v996 = vsel %vm861, %v709, %v932
    %v997 = vsel %vm862, %v712, %v933
    %v998 = vsel %vm863, %v717, %v934
    %v999 = vsel %vm864, %v720, %v935
    %v1000 = vsel %vm865, %v725, %v936
    %v1001 = vsel %vm866, %v728, %v937
    %v1002 = vsel %vm867, %v733, %v938
    %v1003 = vsel %vm868, %v736, %v939
    %v1004 = vsel %vm869, %v741, %v940
    %v1005 = vsel %vm870, %v744, %v941
    %v1006 = vsel %vm871, %v749, %v942
    %v1007 = vsel %vm872, %v752, %v943
    %v1008 = vsel %vm873, %v757, %v944
    %v1009 = vsel %vm874, %v760, %v945
    %v1010 = vsel %vm875, %v765, %v946
    %v1011 = vsel %vm876, %v768, %v947
    %v1012 = vsel %vm877, %v773, %v948
    %v1013 = vsel %vm878, %v776, %v949
    %v1014 = vsel %vm879, %v781, %v950
    %v1015 = vsel %vm880, %v784, %v951
    %v1016 = vsel %vm881, %v789, %v952
    %v1017 = vsel %vm882, %v792, %v953
    %v1018 = vsel %vm883, %v797, %v954
    %v1019 = vsel %vm884, %v800, %v955
    %v1020 = vsel %vm885, %v805, %v956
    %v1021 = vsel %vm886, %v808, %v957
    %v1022 = vsel %vm887, %v813, %v958
    %v1023 = vsel %vm888, %v816, %v959
    %v1024 = vsel %vm889, %v821, %v960
    %v1025 = vsel %vm890, %v824, %v961
    %1026 = vst [vmem:[#allocation2] sm:$0xff] %v962
    %1027 = vst [vmem:[#allocation2 + $0x8] sm:$0xff] %v963
    %1028 = vst [vmem:[#allocation2 + $0x10] sm:$0xff] %v964
    %1029 = vst [vmem:[#allocation2 + $0x18] sm:$0xff] %v965
    %1030 = vst [vmem:[#allocation2 + $0x20] sm:$0xff] %v966
    %1031 = vst [vmem:[#allocation2 + $0x28] sm:$0xff] %v967
    %1032 = vst [vmem:[#allocation2 + $0x30] sm:$0xff] %v968
    %1033 = vst [vmem:[#allocation2 + $0x38] sm:$0xff] %v969
    %1034 = vst [vmem:[#allocation2 + $0x40] sm:$0xff] %v970
    %1035 = vst [vmem:[#allocation2 + $0x48] sm:$0xff] %v971
    %1036 = vst [vmem:[#allocation2 + $0x50] sm:$0xff] %v972
    %1037 = vst [vmem:[#allocation2 + $0x58] sm:$0xff] %v973
    %1038 = vst [vmem:[#allocation2 + $0x60] sm:$0xff] %v974
    %1039 = vst [vmem:[#allocation2 + $0x68] sm:$0xff] %v975
    %1040 = vst [vmem:[#allocation2 + $0x70] sm:$0xff] %v976
    %1041 = vst [vmem:[#allocation2 + $0x78] sm:$0xff] %v977
    %1042 = vst [vmem:[#allocation2 + $0x80] sm:$0xff] %v978
    %1043 = vst [vmem:[#allocation2 + $0x88] sm:$0xff] %v979
    %1044 = vst [vmem:[#allocation2 + $0x90] sm:$0xff] %v980
    %1045 = vst [vmem:[#allocation2 + $0x98] sm:$0xff] %v981
    %1046 = vst [vmem:[#allocation2 + $0xa0] sm:$0xff] %v982
    %1047 = vst [vmem:[#allocation2 + $0xa8] sm:$0xff] %v983
    %1048 = vst [vmem:[#allocation2 + $0xb0] sm:$0xff] %v984
    %1049 = vst [vmem:[#allocation2 + $0xb8] sm:$0xff] %v985
    %1050 = vst [vmem:[#allocation2 + $0xc0] sm:$0xff] %v986
    %1051 = vst [vmem:[#allocation2 + $0xc8] sm:$0xff] %v987
    %1052 = vst [vmem:[#allocation2 + $0xd0] sm:$0xff] %v988
    %1053 = vst [vmem:[#allocation2 + $0xd8] sm:$0xff] %v989
    %1054 = vst [vmem:[#allocation2 + $0xe0] sm:$0xff] %v990
    %1055 = vst [vmem:[#allocation2 + $0xe8] sm:$0xff] %v991
    %1056 = vst [vmem:[#allocation2 + $0xf0] sm:$0xff] %v992
    %1057 = vst [vmem:[#allocation2 + $0xf8] sm:$0xff] %v993
    %1058 = vst [vmem:[#allocation2 + $0x100] sm:$0xff] %v994
    %1059 = vst [vmem:[#allocation2 + $0x108] sm:$0xff] %v995
    %1060 = vst [vmem:[#allocation2 + $0x110] sm:$0xff] %v996
    %1061 = vst [vmem:[#allocation2 + $0x118] sm:$0xff] %v997
    %1062 = vst [vmem:[#allocation2 + $0x120] sm:$0xff] %v998
    %1063 = vst [vmem:[#allocation2 + $0x128] sm:$0xff] %v999
    %1064 = vst [vmem:[#allocation2 + $0x130] sm:$0xff] %v1000
    %1065 = vst [vmem:[#allocation2 + $0x138] sm:$0xff] %v1001
    %1066 = vst [vmem:[#allocation2 + $0x140] sm:$0xff] %v1002
    %1067 = vst [vmem:[#allocation2 + $0x148] sm:$0xff] %v1003
    %1068 = vst [vmem:[#allocation2 + $0x150] sm:$0xff] %v1004
    %1069 = vst [vmem:[#allocation2 + $0x158] sm:$0xff] %v1005
    %1070 = vst [vmem:[#allocation2 + $0x160] sm:$0xff] %v1006
    %1071 = vst [vmem:[#allocation2 + $0x168] sm:$0xff] %v1007
    %1072 = vst [vmem:[#allocation2 + $0x170] sm:$0xff] %v1008
    %1073 = vst [vmem:[#allocation2 + $0x178] sm:$0xff] %v1009
    %1074 = vst [vmem:[#allocation2 + $0x180] sm:$0xff] %v1010
    %1075 = vst [vmem:[#allocation2 + $0x188] sm:$0xff] %v1011
    %1076 = vst [vmem:[#allocation2 + $0x190] sm:$0xff] %v1012
    %1077 = vst [vmem:[#allocation2 + $0x198] sm:$0xff] %v1013
    %1078 = vst [vmem:[#allocation2 + $0x1a0] sm:$0xff] %v1014
    %1079 = vst [vmem:[#allocation2 + $0x1a8] sm:$0xff] %v1015
    %1080 = vst [vmem:[#allocation2 + $0x1b0] sm:$0xff] %v1016
    %1081 = vst [vmem:[#allocation2 + $0x1b8] sm:$0xff] %v1017
    %1082 = vst [vmem:[#allocation2 + $0x1c0] sm:$0xff] %v1018
    %1083 = vst [vmem:[#allocation2 + $0x1c8] sm:$0xff] %v1019
    %1084 = vst [vmem:[#allocation2 + $0x1d0] sm:$0xff] %v1020
    %1085 = vst [vmem:[#allocation2 + $0x1d8] sm:$0xff] %v1021
    %1086 = vst [vmem:[#allocation2 + $0x1e0] sm:$0xff] %v1022
    %1087 = vst [vmem:[#allocation2 + $0x1e8] sm:$0xff] %v1023
    %1088 = vst [vmem:[#allocation2 + $0x1f0] sm:$0xff] %v1024
    %1089 = vst [vmem:[#allocation2 + $0x1f8] sm:$0xff] %v1025
    // Predicated region
    $region18: #{conv2d_apply.1} parent=1 // pred_check
      _
    $region19: #{conv2d_apply.1} parent=1 // pred_check_branch
      %1091 = sbr.rel (0) target = $region21
    $region20: #{conv2d_apply.1} parent=1 // pred_region
      %s1093 = ssub.s32 8192, 8192
      %1094 = vsyncadd [#allocation3], %s1093
      %s1095 = sshll.u32 [#allocation2], 4
      %s1096 = int_to_ptr.vmem [resolvable:$true] %s1095
      %1101 = dma.vmem_to_hbm [thread:$0]  %s1096, 8192, %s4, [#allocation3], 128, 128, 8
    $region21: #{conv2d_apply.1} parent=1 // pred_fallthru
      _
    // Predicated region
    $region22: #{conv2d_apply.1} parent=1 // pred_check
      _
    $region23: #{conv2d_apply.1} parent=1 // pred_check_branch
      %1103 = sbr.rel (0) target = $region25
    $region24: #{conv2d_apply.1} parent=1 // pred_region
      %1104 = dma.done [#allocation3], 8192
    $region25: #{conv2d_apply.1} parent=1 // pred_fallthru
      _
    %1105 = vsyncpa [#allocation3], 1

</llo_original>
